<compile_context>
chip_gen: v5e
topology: v5e:2x2
jax: 0.10.0
libtpu: 0.0.40
codegen_flags: <defaults>
</compile_context>

<pallas_src>
import jax
import jax.numpy as jnp
from jax.experimental import pallas as pl
from jax.experimental.pallas import tpu as pltpu

_EPS = 1e-5


def _make_residual_kernel(N, H, W, Cin, Cout, use_proj):
    NH = N * H
    WC = W * Cout
    M = N * H * W
    inv_M = 1.0 / M

    assert W & (W - 1) == 0, "BN lane roll-reduce assumes power-of-two W"

    def _bn_scale_shift(acc, g_t, be_t):
        """One-pass BN stats on a lane-dense (NH, W*Cout) f32 activation.

        Returns per-lane scale/shift (already replicated over the W lane
        groups) so normalization is a single FMA.  No reshape / tile: the
        channel fold uses a log2(W) circular lane roll-reduce.
        """
        s = jnp.sum(acc, axis=0, keepdims=True)                 # (1, WC)
        ss = jnp.sum(acc * acc, axis=0, keepdims=True)          # (1, WC)
        stats = jnp.concatenate([s, ss], axis=0)                # (2, WC)
        shift = Cout
        while shift < WC:                                       # log2(W) steps
            stats = stats + pltpu.roll(stats, shift=shift, axis=1)
            shift *= 2
        mu = stats[0:1] * inv_M                                 # per-lane mean
        var = stats[1:2] * inv_M - mu * mu                      # biased var
        scale = g_t * jax.lax.rsqrt(var + _EPS)                 # (1, WC)
        sh = be_t - mu * scale                                  # (1, WC)
        return scale, sh

    def _conv3x3(lhs_bf16, t_ref, mask_top, mask_bot):
        """3x3 'SAME' conv as 3 lane-dense matmuls (one per vertical tap).

        t_ref[kh] is a block-Toeplitz (K, W*Cout) weight that already encodes
        the horizontal taps + zero padding.  Vertical taps are combined with
        circular sublane rolls masked at per-image row boundaries.
        """
        p0 = jnp.dot(lhs_bf16, t_ref[0], preferred_element_type=jnp.float32)
        p1 = jnp.dot(lhs_bf16, t_ref[1], preferred_element_type=jnp.float32)
        p2 = jnp.dot(lhs_bf16, t_ref[2], preferred_element_type=jnp.float32)
        acc = p1
        acc = acc + mask_top * pltpu.roll(p0, shift=1, axis=0)        # row above
        acc = acc + mask_bot * pltpu.roll(p2, shift=NH - 1, axis=0)   # row below
        return acc

    def kernel(*refs):
        if use_proj:
            (x_ref, t1_ref, g1_ref, be1_ref, t2_ref, g2_ref, be2_ref,
             tp_ref, b3_ref, out_ref) = refs
        else:
            (x_ref, t1_ref, g1_ref, be1_ref, t2_ref, g2_ref, be2_ref,
             out_ref) = refs

        # Per-image row masks for the vertical conv taps (first / last row of
        # each image must not read the neighbouring image through the roll).
        row = jax.lax.broadcasted_iota(jnp.int32, (NH, 1), 0)
        mask_top = (row % H != 0).astype(jnp.float32)
        mask_bot = (row % H != (H - 1)).astype(jnp.float32)

        x_f32 = x_ref[...]                       # (NH, W*Cin) lane-dense
        x_bf16 = x_f32.astype(jnp.bfloat16)      # bf16 MXU operand, f32 accum

        # ---- conv1 + bn1 + relu (bias b1 omitted: cancels in training BN) ----
        acc1 = _conv3x3(x_bf16, t1_ref, mask_top, mask_bot)
        sc1, sh1 = _bn_scale_shift(acc1, g1_ref[...], be1_ref[...])
        y = jnp.maximum(acc1 * sc1 + sh1, 0.0)                  # (NH, WC)

        # ---- conv2 + bn2 (bias b2 omitted: same cancellation) ----
        acc2 = _conv3x3(y.astype(jnp.bfloat16), t2_ref, mask_top, mask_bot)
        sc2, sh2 = _bn_scale_shift(acc2, g2_ref[...], be2_ref[...])
        y2 = acc2 * sc2 + sh2                                   # bn2, no relu yet

        # ---- skip connection + final relu, all lane-dense ----
        if use_proj:
            skip = jnp.dot(x_bf16, tp_ref[...],
                           preferred_element_type=jnp.float32) + b3_ref[...]
        else:
            skip = x_f32                     # Cin == Cout identity skip (exact)

        out_ref[...] = jnp.maximum(y2 + skip, 0.0).astype(out_ref.dtype)

    return kernel


def _toeplitz_3x3(w_hwio, W):
    """(3,3,Cin,Cout) HWIO conv weights -> (3, W*Cin, W*Cout) block-Toeplitz.

    T[kh, w_in*Cin+ci, w_out*Cout+co] = w[kh, kw, ci, co] with kw = w_in-w_out+1
    (zero outside the 3-tap band), i.e. 'SAME' zero padding is baked into the
    weight matrix and the conv becomes plain matmuls on the lane-dense slab.
    """
    Cin, Cout = w_hwio.shape[2], w_hwio.shape[3]
    wi = jnp.arange(W)[:, None, None]            # w_in
    wo = jnp.arange(W)[None, :, None]            # w_out
    kk = jnp.arange(3)[None, None, :]            # kw
    sel = (wi == wo + kk - 1).astype(w_hwio.dtype)          # (W_in, W_out, 3)
    t = jnp.einsum("pqk,hkio->hpiqo", sel, w_hwio)          # (3,Win,Cin,Wout,Cout)
    return t.reshape(3, W * Cin, W * Cout)


def _toeplitz_1x1(w_io, W):
    """(Cin,Cout) 1x1 conv weights -> (W*Cin, W*Cout) block-diagonal matrix."""
    eye = jnp.eye(W, dtype=w_io.dtype)
    t = jnp.einsum("pq,io->piqo", eye, w_io)                 # (W,Cin,W,Cout)
    return t.reshape(W * w_io.shape[0], W * w_io.shape[1])


def residual_forward(x_nhwc, params, use_1x1conv=False, stride=1):
    """Residual block forward on an NHWC activation (no HBM transposes)."""
    assert stride == 1  # TODO(synk): stride > 1 downsampling not implemented in-kernel
    N, H, W, Cin = x_nhwc.shape
    Cout = params["w1"].shape[-1]
    if not use_1x1conv:
        assert Cin == Cout
    NH, WC = N * H, W * Cout

    # Lane-dense 2-D input slab: free contiguous reshape of NHWC in HBM.
    x2d = x_nhwc.reshape(NH, W * Cin).astype(jnp.float32)

    # Tiny wrapper-side weight prep: block-Toeplitz conv matrices (bf16 for the
    # MXU) and per-channel BN params pre-tiled to the lane-dense layout (f32).
    t1 = _toeplitz_3x3(params["w1"].astype(jnp.float32), W).astype(jnp.bfloat16)
    t2 = _toeplitz_3x3(params["w2"].astype(jnp.float32), W).astype(jnp.bfloat16)
    g1 = jnp.tile(params["g1"].astype(jnp.float32), (1, W))
    be1 = jnp.tile(params["be1"].astype(jnp.float32), (1, W))
    g2 = jnp.tile(params["g2"].astype(jnp.float32), (1, W))
    be2 = jnp.tile(params["be2"].astype(jnp.float32), (1, W))

    inputs = [x2d, t1, g1, be1, t2, g2, be2]
    if use_1x1conv:
        tp = _toeplitz_1x1(params["w3"].astype(jnp.float32), W).astype(jnp.bfloat16)
        b3 = jnp.tile(params["b3"].astype(jnp.float32), (1, W))
        inputs += [tp, b3]

    vmem = pl.BlockSpec(memory_space=pltpu.MemorySpace.VMEM)
    # TODO(synk): add an N*H row-band grid (dimension_semantics=("parallel",))
    # with cross-band BN-stat accumulation before scaling past demo shapes;
    # re-derive the band size per chip generation (v7x: 64 MiB VMEM).
    out2d = pl.pallas_call(
        _make_residual_kernel(N, H, W, Cin, Cout, use_1x1conv),
        out_shape=jax.ShapeDtypeStruct((NH, WC), jnp.float32),
        in_specs=[vmem] * len(inputs),
        out_specs=vmem,
        compiler_params=pltpu.CompilerParams(vmem_limit_bytes=16 * 1024 * 1024),
    )(*inputs)

    return out2d.reshape(N, H, W, Cout)      # free contiguous reshape, NHWC out


residual_forward_jit = jax.jit(residual_forward,
                               static_argnames=("use_1x1conv", "stride"))


def init_params(key, cin, cout, use_1x1conv):
    """Deterministic synthetic parameters (shapes match the PyTorch module)."""
    ks = jax.random.split(key, 6)
    s1 = 1.0 / (9 * cin) ** 0.5
    s2 = 1.0 / (9 * cout) ** 0.5
    p = {
        # conv weights stored HWIO (== PyTorch OIHW transposed to (kh,kw,in,out))
        "w1": jax.random.uniform(ks[0], (3, 3, cin, cout), jnp.float32, -s1, s1),
        "b1": jax.random.uniform(ks[1], (1, cout), jnp.float32, -s1, s1),
        "w2": jax.random.uniform(ks[2], (3, 3, cout, cout), jnp.float32, -s2, s2),
        "b2": jax.random.uniform(ks[3], (1, cout), jnp.float32, -s2, s2),
        # BatchNorm2d default init: gamma=1, beta=0
        "g1": jnp.ones((1, cout), jnp.float32),
        "be1": jnp.zeros((1, cout), jnp.float32),
        "g2": jnp.ones((1, cout), jnp.float32),
        "be2": jnp.zeros((1, cout), jnp.float32),
    }
    if use_1x1conv:
        s3 = 1.0 / cin ** 0.5
        p["w3"] = jax.random.uniform(ks[4], (cin, cout), jnp.float32, -s3, s3)
        p["b3"] = jax.random.uniform(ks[5], (1, cout), jnp.float32, -s3, s3)
    return p


def residual_ref(x_nhwc, p, use_1x1conv):
    """Pure-JAX f32 reference of the same forward pass (correctness check)."""
    x = x_nhwc.astype(jnp.float32)

    def conv3(a, w, b):
        y = jax.lax.conv_general_dilated(
            a, w, window_strides=(1, 1), padding="SAME",
            dimension_numbers=("NHWC", "HWIO", "NHWC"))
        return y + b.reshape(1, 1, 1, -1)

    def bn(a, g, b):
        m = a.mean(axis=(0, 1, 2), keepdims=True)
        v = ((a - m) ** 2).mean(axis=(0, 1, 2), keepdims=True)
        return (a - m) * jax.lax.rsqrt(v + _EPS) * g.reshape(1, 1, 1, -1) + b.reshape(1, 1, 1, -1)

    y = jax.nn.relu(bn(conv3(x, p["w1"], p["b1"]), p["g1"], p["be1"]))
    y = bn(conv3(y, p["w2"], p["b2"]), p["g2"], p["be2"])
    skip = (jnp.einsum("nhwc,cd->nhwd", x, p["w3"]) + p["b3"].reshape(1, 1, 1, -1)
            if use_1x1conv else x)
    return jax.nn.relu(y + skip)


if __name__ == "__main__":
    key = jax.random.PRNGKey(0)
    kx, kp1, kp2 = jax.random.split(key, 3)
    # NHWC activation (N=2, H=W=16, C=4); same data as an NCHW (2,4,16,16)
    # tensor viewed channels-last.
    x = jax.random.normal(kx, (2, 16, 16, 4), jnp.float32)

    # Tolerance is loosened vs. a pure-f32 kernel because the conv matmuls use
    # bf16 MXU operands (f32 accumulation) per the performance review; real
    # bugs produce errors >= 1e-1, so 5e-2 still catches them.
    TOL = 5e-2

    # Config A: module defaults — identity skip, stride=1, 4 -> 4 channels.
    pA = init_params(kp1, 4, 4, use_1x1conv=False)
    outA = jax.block_until_ready(residual_forward_jit(x, pA, use_1x1conv=False))
    refA = residual_ref(x, pA, False)
    assert outA.shape == (2, 16, 16, 4)
    errA = float(jnp.max(jnp.abs(outA - refA)))
    assert jnp.allclose(outA, refA, atol=TOL, rtol=TOL), errA

    # Config B: 1x1-conv projection skip, 4 -> 8 channels.
    pB = init_params(kp2, 4, 8, use_1x1conv=True)
    outB = jax.block_until_ready(residual_forward_jit(x, pB, use_1x1conv=True))
    refB = residual_ref(x, pB, True)
    assert outB.shape == (2, 16, 16, 8)
    errB = float(jnp.max(jnp.abs(outB - refB)))
    assert jnp.allclose(outB, refB, atol=TOL, rtol=TOL), errB

    print("KERNEL_OK")
</pallas_src>

<mosaic_0001>
module attributes {stable_mosaic.version = 11 : i64} {
  func.func @kernel(%arg0: memref<32x64xf32, #tpu.memory_space<vmem>>, %arg1: memref<3x64x64xbf16, #tpu.memory_space<vmem>>, %arg2: memref<1x64xf32, #tpu.memory_space<vmem>>, %arg3: memref<1x64xf32, #tpu.memory_space<vmem>>, %arg4: memref<3x64x64xbf16, #tpu.memory_space<vmem>>, %arg5: memref<1x64xf32, #tpu.memory_space<vmem>>, %arg6: memref<1x64xf32, #tpu.memory_space<vmem>>, %arg7: memref<32x64xf32, #tpu.memory_space<vmem>>) attributes {dimension_semantics = [], scalar_prefetch = 0 : i64, scratch_operands = 0 : i64, tpu.core_type = #tpu.core_type<tc>} {
    %0 = tpu.iota {dimensions = array<i32: 0>} : vector<32x1xi32>
    %c16_i32 = arith.constant 16 : i32
    %c0_i32 = arith.constant 0 : i32
    %1 = arith.cmpi eq, %c16_i32, %c0_i32 : i32
    %c1_i32 = arith.constant 1 : i32
    %2 = arith.select %1, %c1_i32, %c16_i32 : i32
    %3 = vector.broadcast %2 : i32 to vector<32x1xi32>
    %4 = arith.remsi %0, %3 : vector<32x1xi32>
    %c0_i32_0 = arith.constant 0 : i32
    %5 = vector.broadcast %c0_i32_0 : i32 to vector<32x1xi32>
    %6 = arith.cmpi ne, %4, %5 : vector<32x1xi32>
    %c0_i32_1 = arith.constant 0 : i32
    %7 = vector.broadcast %c0_i32_1 : i32 to vector<32x1xi32>
    %8 = arith.cmpi slt, %4, %7 : vector<32x1xi32>
    %c0_i32_2 = arith.constant 0 : i32
    %9 = arith.cmpi slt, %2, %c0_i32_2 : i32
    %10 = vector.broadcast %9 : i1 to vector<32x1xi1>
    %11 = vector.broadcast %10 : vector<32x1xi1> to vector<32x1xi1>
    %12 = arith.xori %8, %11 : vector<32x1xi1>
    %13 = arith.andi %12, %6 : vector<32x1xi1>
    %14 = vector.broadcast %2 : i32 to vector<32x1xi32>
    %15 = arith.addi %4, %14 : vector<32x1xi32>
    %16 = arith.select %13, %15, %4 : vector<32x1xi1>, vector<32x1xi32>
    %c0_i32_3 = arith.constant 0 : i32
    %17 = vector.broadcast %c0_i32_3 : i32 to vector<32x1xi32>
    %18 = arith.cmpi ne, %16, %17 : vector<32x1xi32>
    %19 = arith.extui %18 : vector<32x1xi1> to vector<32x1xi32>
    %20 = arith.sitofp %19 : vector<32x1xi32> to vector<32x1xf32>
    %c16_i32_4 = arith.constant 16 : i32
    %c0_i32_5 = arith.constant 0 : i32
    %21 = arith.cmpi eq, %c16_i32_4, %c0_i32_5 : i32
    %c1_i32_6 = arith.constant 1 : i32
    %22 = arith.select %21, %c1_i32_6, %c16_i32_4 : i32
    %23 = vector.broadcast %22 : i32 to vector<32x1xi32>
    %24 = arith.remsi %0, %23 : vector<32x1xi32>
    %c0_i32_7 = arith.constant 0 : i32
    %25 = vector.broadcast %c0_i32_7 : i32 to vector<32x1xi32>
    %26 = arith.cmpi ne, %24, %25 : vector<32x1xi32>
    %c0_i32_8 = arith.constant 0 : i32
    %27 = vector.broadcast %c0_i32_8 : i32 to vector<32x1xi32>
    %28 = arith.cmpi slt, %24, %27 : vector<32x1xi32>
    %c0_i32_9 = arith.constant 0 : i32
    %29 = arith.cmpi slt, %22, %c0_i32_9 : i32
    %30 = vector.broadcast %29 : i1 to vector<32x1xi1>
    %31 = vector.broadcast %30 : vector<32x1xi1> to vector<32x1xi1>
    %32 = arith.xori %28, %31 : vector<32x1xi1>
    %33 = arith.andi %32, %26 : vector<32x1xi1>
    %34 = vector.broadcast %22 : i32 to vector<32x1xi32>
    %35 = arith.addi %24, %34 : vector<32x1xi32>
    %36 = arith.select %33, %35, %24 : vector<32x1xi1>, vector<32x1xi32>
    %c15_i32 = arith.constant 15 : i32
    %37 = vector.broadcast %c15_i32 : i32 to vector<32x1xi32>
    %38 = arith.cmpi ne, %36, %37 : vector<32x1xi32>
    %39 = arith.extui %38 : vector<32x1xi1> to vector<32x1xi32>
    %40 = arith.sitofp %39 : vector<32x1xi32> to vector<32x1xf32>
    %c0 = arith.constant 0 : index
    %c0_10 = arith.constant 0 : index
    %41 = vector.load %arg0[%c0, %c0_10] : memref<32x64xf32, #tpu.memory_space<vmem>>, vector<32x64xf32>
    %42 = arith.truncf %41 : vector<32x64xf32> to vector<32x64xbf16>
    %c0_11 = arith.constant 0 : index
    %c0_12 = arith.constant 0 : index
    %c0_13 = arith.constant 0 : index
    %43 = vector.load %arg1[%c0_11, %c0_12, %c0_13] : memref<3x64x64xbf16, #tpu.memory_space<vmem>>, vector<1x64x64xbf16>
    %44 = vector.shape_cast %43 : vector<1x64x64xbf16> to vector<64x64xbf16>
    %cst = arith.constant dense<0.000000e+00> : vector<32x64xf32>
    %45 = tpu.matmul %42, %44, %cst {dimension_numbers = #tpu.dot_dimension_numbers<[1], [0], [0], [1], [0, 0, 1, 1], [], []>} : vector<32x64xbf16>, vector<64x64xbf16>, vector<32x64xf32> -> vector<32x64xf32>
    %c1 = arith.constant 1 : index
    %c0_14 = arith.constant 0 : index
    %c0_15 = arith.constant 0 : index
    %46 = vector.load %arg1[%c1, %c0_14, %c0_15] : memref<3x64x64xbf16, #tpu.memory_space<vmem>>, vector<1x64x64xbf16>
    %47 = vector.shape_cast %46 : vector<1x64x64xbf16> to vector<64x64xbf16>
    %cst_16 = arith.constant dense<0.000000e+00> : vector<32x64xf32>
    %48 = tpu.matmul %42, %47, %cst_16 {dimension_numbers = #tpu.dot_dimension_numbers<[1], [0], [0], [1], [0, 0, 1, 1], [], []>} : vector<32x64xbf16>, vector<64x64xbf16>, vector<32x64xf32> -> vector<32x64xf32>
    %c2 = arith.constant 2 : index
    %c0_17 = arith.constant 0 : index
    %c0_18 = arith.constant 0 : index
    %49 = vector.load %arg1[%c2, %c0_17, %c0_18] : memref<3x64x64xbf16, #tpu.memory_space<vmem>>, vector<1x64x64xbf16>
    %50 = vector.shape_cast %49 : vector<1x64x64xbf16> to vector<64x64xbf16>
    %cst_19 = arith.constant dense<0.000000e+00> : vector<32x64xf32>
    %51 = tpu.matmul %42, %50, %cst_19 {dimension_numbers = #tpu.dot_dimension_numbers<[1], [0], [0], [1], [0, 0, 1, 1], [], []>} : vector<32x64xbf16>, vector<64x64xbf16>, vector<32x64xf32> -> vector<32x64xf32>
    %c1_i32_20 = arith.constant 1 : i32
    %52 = tpu.dynamic_rotate %45 by %c1_i32_20 dim 0 : vector<32x64xf32>, i32 -> vector<32x64xf32>
    %53 = vector.broadcast %20 : vector<32x1xf32> to vector<32x64xf32>
    %54 = arith.mulf %53, %52 : vector<32x64xf32>
    %55 = arith.addf %48, %54 : vector<32x64xf32>
    %c31_i32 = arith.constant 31 : i32
    %56 = tpu.dynamic_rotate %51 by %c31_i32 dim 0 : vector<32x64xf32>, i32 -> vector<32x64xf32>
    %57 = vector.broadcast %40 : vector<32x1xf32> to vector<32x64xf32>
    %58 = arith.mulf %57, %56 : vector<32x64xf32>
    %59 = arith.addf %55, %58 : vector<32x64xf32>
    %c0_21 = arith.constant 0 : index
    %c0_22 = arith.constant 0 : index
    %60 = vector.load %arg2[%c0_21, %c0_22] : memref<1x64xf32, #tpu.memory_space<vmem>>, vector<1x64xf32>
    %c0_23 = arith.constant 0 : index
    %c0_24 = arith.constant 0 : index
    %61 = vector.load %arg3[%c0_23, %c0_24] : memref<1x64xf32, #tpu.memory_space<vmem>>, vector<1x64xf32>
    %cst_25 = arith.constant dense<0.000000e+00> : vector<64xf32>
    %62 = vector.multi_reduction <add>, %59, %cst_25 [0] : vector<32x64xf32> to vector<64xf32>
    %63 = vector.shape_cast %62 : vector<64xf32> to vector<1x64xf32>
    %64 = arith.mulf %59, %59 : vector<32x64xf32>
    %cst_26 = arith.constant dense<0.000000e+00> : vector<64xf32>
    %65 = vector.multi_reduction <add>, %64, %cst_26 [0] : vector<32x64xf32> to vector<64xf32>
    %66 = vector.shape_cast %65 : vector<64xf32> to vector<1x64xf32>
    %67 = tpu.concatenate %63, %66 in 0 : vector<1x64xf32>, vector<1x64xf32> -> vector<2x64xf32>
    %c4_i32 = arith.constant 4 : i32
    %68 = tpu.dynamic_rotate %67 by %c4_i32 dim 1 : vector<2x64xf32>, i32 -> vector<2x64xf32>
    %69 = arith.addf %67, %68 : vector<2x64xf32>
    %c8_i32 = arith.constant 8 : i32
    %70 = tpu.dynamic_rotate %69 by %c8_i32 dim 1 : vector<2x64xf32>, i32 -> vector<2x64xf32>
    %71 = arith.addf %69, %70 : vector<2x64xf32>
    %c16_i32_27 = arith.constant 16 : i32
    %72 = tpu.dynamic_rotate %71 by %c16_i32_27 dim 1 : vector<2x64xf32>, i32 -> vector<2x64xf32>
    %73 = arith.addf %71, %72 : vector<2x64xf32>
    %c32_i32 = arith.constant 32 : i32
    %74 = tpu.dynamic_rotate %73 by %c32_i32 dim 1 : vector<2x64xf32>, i32 -> vector<2x64xf32>
    %75 = arith.addf %73, %74 : vector<2x64xf32>
    %76 = vector.extract_strided_slice %75 {offsets = [0, 0], sizes = [1, 64], strides = [1, 1]} : vector<2x64xf32> to vector<1x64xf32>
    %cst_28 = arith.constant 0.001953125 : f32
    %77 = vector.broadcast %cst_28 : f32 to vector<1x64xf32>
    %78 = arith.mulf %76, %77 : vector<1x64xf32>
    %79 = vector.extract_strided_slice %75 {offsets = [1, 0], sizes = [1, 64], strides = [1, 1]} : vector<2x64xf32> to vector<1x64xf32>
    %cst_29 = arith.constant 0.001953125 : f32
    %80 = vector.broadcast %cst_29 : f32 to vector<1x64xf32>
    %81 = arith.mulf %79, %80 : vector<1x64xf32>
    %82 = arith.mulf %78, %78 : vector<1x64xf32>
    %83 = arith.subf %81, %82 : vector<1x64xf32>
    %cst_30 = arith.constant 9.99999974E-6 : f32
    %84 = vector.broadcast %cst_30 : f32 to vector<1x64xf32>
    %85 = arith.addf %83, %84 : vector<1x64xf32>
    %86 = math.rsqrt %85 : vector<1x64xf32>
    %87 = arith.mulf %60, %86 : vector<1x64xf32>
    %88 = arith.mulf %78, %87 : vector<1x64xf32>
    %89 = arith.subf %61, %88 : vector<1x64xf32>
    %90 = vector.broadcast %87 : vector<1x64xf32> to vector<32x64xf32>
    %91 = arith.mulf %59, %90 : vector<32x64xf32>
    %92 = vector.broadcast %89 : vector<1x64xf32> to vector<32x64xf32>
    %93 = arith.addf %91, %92 : vector<32x64xf32>
    %cst_31 = arith.constant 0.000000e+00 : f32
    %94 = vector.broadcast %cst_31 : f32 to vector<32x64xf32>
    %95 = arith.maximumf %93, %94 : vector<32x64xf32>
    %96 = arith.truncf %95 : vector<32x64xf32> to vector<32x64xbf16>
    %c0_32 = arith.constant 0 : index
    %c0_33 = arith.constant 0 : index
    %c0_34 = arith.constant 0 : index
    %97 = vector.load %arg4[%c0_32, %c0_33, %c0_34] : memref<3x64x64xbf16, #tpu.memory_space<vmem>>, vector<1x64x64xbf16>
    %98 = vector.shape_cast %97 : vector<1x64x64xbf16> to vector<64x64xbf16>
    %cst_35 = arith.constant dense<0.000000e+00> : vector<32x64xf32>
    %99 = tpu.matmul %96, %98, %cst_35 {dimension_numbers = #tpu.dot_dimension_numbers<[1], [0], [0], [1], [0, 0, 1, 1], [], []>} : vector<32x64xbf16>, vector<64x64xbf16>, vector<32x64xf32> -> vector<32x64xf32>
    %c1_36 = arith.constant 1 : index
    %c0_37 = arith.constant 0 : index
    %c0_38 = arith.constant 0 : index
    %100 = vector.load %arg4[%c1_36, %c0_37, %c0_38] : memref<3x64x64xbf16, #tpu.memory_space<vmem>>, vector<1x64x64xbf16>
    %101 = vector.shape_cast %100 : vector<1x64x64xbf16> to vector<64x64xbf16>
    %cst_39 = arith.constant dense<0.000000e+00> : vector<32x64xf32>
    %102 = tpu.matmul %96, %101, %cst_39 {dimension_numbers = #tpu.dot_dimension_numbers<[1], [0], [0], [1], [0, 0, 1, 1], [], []>} : vector<32x64xbf16>, vector<64x64xbf16>, vector<32x64xf32> -> vector<32x64xf32>
    %c2_40 = arith.constant 2 : index
    %c0_41 = arith.constant 0 : index
    %c0_42 = arith.constant 0 : index
    %103 = vector.load %arg4[%c2_40, %c0_41, %c0_42] : memref<3x64x64xbf16, #tpu.memory_space<vmem>>, vector<1x64x64xbf16>
    %104 = vector.shape_cast %103 : vector<1x64x64xbf16> to vector<64x64xbf16>
    %cst_43 = arith.constant dense<0.000000e+00> : vector<32x64xf32>
    %105 = tpu.matmul %96, %104, %cst_43 {dimension_numbers = #tpu.dot_dimension_numbers<[1], [0], [0], [1], [0, 0, 1, 1], [], []>} : vector<32x64xbf16>, vector<64x64xbf16>, vector<32x64xf32> -> vector<32x64xf32>
    %c1_i32_44 = arith.constant 1 : i32
    %106 = tpu.dynamic_rotate %99 by %c1_i32_44 dim 0 : vector<32x64xf32>, i32 -> vector<32x64xf32>
    %107 = vector.broadcast %20 : vector<32x1xf32> to vector<32x64xf32>
    %108 = arith.mulf %107, %106 : vector<32x64xf32>
    %109 = arith.addf %102, %108 : vector<32x64xf32>
    %c31_i32_45 = arith.constant 31 : i32
    %110 = tpu.dynamic_rotate %105 by %c31_i32_45 dim 0 : vector<32x64xf32>, i32 -> vector<32x64xf32>
    %111 = vector.broadcast %40 : vector<32x1xf32> to vector<32x64xf32>
    %112 = arith.mulf %111, %110 : vector<32x64xf32>
    %113 = arith.addf %109, %112 : vector<32x64xf32>
    %c0_46 = arith.constant 0 : index
    %c0_47 = arith.constant 0 : index
    %114 = vector.load %arg5[%c0_46, %c0_47] : memref<1x64xf32, #tpu.memory_space<vmem>>, vector<1x64xf32>
    %c0_48 = arith.constant 0 : index
    %c0_49 = arith.constant 0 : index
    %115 = vector.load %arg6[%c0_48, %c0_49] : memref<1x64xf32, #tpu.memory_space<vmem>>, vector<1x64xf32>
    %cst_50 = arith.constant dense<0.000000e+00> : vector<64xf32>
    %116 = vector.multi_reduction <add>, %113, %cst_50 [0] : vector<32x64xf32> to vector<64xf32>
    %117 = vector.shape_cast %116 : vector<64xf32> to vector<1x64xf32>
    %118 = arith.mulf %113, %113 : vector<32x64xf32>
    %cst_51 = arith.constant dense<0.000000e+00> : vector<64xf32>
    %119 = vector.multi_reduction <add>, %118, %cst_51 [0] : vector<32x64xf32> to vector<64xf32>
    %120 = vector.shape_cast %119 : vector<64xf32> to vector<1x64xf32>
    %121 = tpu.concatenate %117, %120 in 0 : vector<1x64xf32>, vector<1x64xf32> -> vector<2x64xf32>
    %c4_i32_52 = arith.constant 4 : i32
    %122 = tpu.dynamic_rotate %121 by %c4_i32_52 dim 1 : vector<2x64xf32>, i32 -> vector<2x64xf32>
    %123 = arith.addf %121, %122 : vector<2x64xf32>
    %c8_i32_53 = arith.constant 8 : i32
    %124 = tpu.dynamic_rotate %123 by %c8_i32_53 dim 1 : vector<2x64xf32>, i32 -> vector<2x64xf32>
    %125 = arith.addf %123, %124 : vector<2x64xf32>
    %c16_i32_54 = arith.constant 16 : i32
    %126 = tpu.dynamic_rotate %125 by %c16_i32_54 dim 1 : vector<2x64xf32>, i32 -> vector<2x64xf32>
    %127 = arith.addf %125, %126 : vector<2x64xf32>
    %c32_i32_55 = arith.constant 32 : i32
    %128 = tpu.dynamic_rotate %127 by %c32_i32_55 dim 1 : vector<2x64xf32>, i32 -> vector<2x64xf32>
    %129 = arith.addf %127, %128 : vector<2x64xf32>
    %130 = vector.extract_strided_slice %129 {offsets = [0, 0], sizes = [1, 64], strides = [1, 1]} : vector<2x64xf32> to vector<1x64xf32>
    %cst_56 = arith.constant 0.001953125 : f32
    %131 = vector.broadcast %cst_56 : f32 to vector<1x64xf32>
    %132 = arith.mulf %130, %131 : vector<1x64xf32>
    %133 = vector.extract_strided_slice %129 {offsets = [1, 0], sizes = [1, 64], strides = [1, 1]} : vector<2x64xf32> to vector<1x64xf32>
    %cst_57 = arith.constant 0.001953125 : f32
    %134 = vector.broadcast %cst_57 : f32 to vector<1x64xf32>
    %135 = arith.mulf %133, %134 : vector<1x64xf32>
    %136 = arith.mulf %132, %132 : vector<1x64xf32>
    %137 = arith.subf %135, %136 : vector<1x64xf32>
    %cst_58 = arith.constant 9.99999974E-6 : f32
    %138 = vector.broadcast %cst_58 : f32 to vector<1x64xf32>
    %139 = arith.addf %137, %138 : vector<1x64xf32>
    %140 = math.rsqrt %139 : vector<1x64xf32>
    %141 = arith.mulf %114, %140 : vector<1x64xf32>
    %142 = arith.mulf %132, %141 : vector<1x64xf32>
    %143 = arith.subf %115, %142 : vector<1x64xf32>
    %144 = vector.broadcast %141 : vector<1x64xf32> to vector<32x64xf32>
    %145 = arith.mulf %113, %144 : vector<32x64xf32>
    %146 = vector.broadcast %143 : vector<1x64xf32> to vector<32x64xf32>
    %147 = arith.addf %145, %146 : vector<32x64xf32>
    %148 = arith.addf %147, %41 : vector<32x64xf32>
    %cst_59 = arith.constant 0.000000e+00 : f32
    %149 = vector.broadcast %cst_59 : f32 to vector<32x64xf32>
    %150 = arith.maximumf %148, %149 : vector<32x64xf32>
    %c0_60 = arith.constant 0 : index
    %c0_61 = arith.constant 0 : index
    %151 = vector.load %arg7[%c0_60, %c0_61] : memref<32x64xf32, #tpu.memory_space<vmem>>, vector<32x64xf32>
    tpu.vector_store %arg7[%c0_60, %c0_61], %150 {strides = array<i32>} : memref<32x64xf32, #tpu.memory_space<vmem>>, vector<32x64xf32>,
    return
  }
}

</mosaic_0001>

<llo_original>
// kernel: residual_forward.1
$region0: #{residual_forward.1}
  #allocation0 [shape = 'u32[]', space=smem, size = 0x4, offset = 0x4, fixed_abs, tag = 'smem constant byte address 0x4 - core index']
  #allocation1 [shape = 'u32[72,128]{1,0:T(1,128)}', space=vmem, size = 0x9000, scoped, tag = 'internal scratch']
  %s0 = inlined_call_operand.vmem [shape: f32[32,64], index: 0, kind: input, shape index: {}]
  %s1 = inlined_call_operand.vmem [shape: bf16[3,64,64], index: 1, kind: input, shape index: {}]
  %s2 = inlined_call_operand.vmem [shape: f32[1,64], index: 2, kind: input, shape index: {}]
  %s3 = inlined_call_operand.vmem [shape: f32[1,64], index: 3, kind: input, shape index: {}]
  %s4 = inlined_call_operand.vmem [shape: bf16[3,64,64], index: 4, kind: input, shape index: {}]
  %s5 = inlined_call_operand.vmem [shape: f32[1,64], index: 5, kind: input, shape index: {}]
  %s6 = inlined_call_operand.vmem [shape: f32[1,64], index: 6, kind: input, shape index: {}]
  %s7 = inlined_call_operand.vmem [shape: f32[32,64], index: 7, kind: output, shape index: {}]
  %s8 = sld [smem:[#allocation0]]
  $region38: #{residual_forward.1} parent=0
    _
  %s10 = ssub.s32 1, %s8
  %s11 = scalar_select 0, %s10, %s8
  // Predicated region
  $region2: #{residual_forward.1} parent=0 // pred_check
    _
  $region3: #{residual_forward.1} parent=0 // pred_check_branch
    %13 = sbr.rel (0) target = $region5
  $region4: #{residual_forward.1} parent=0 // pred_region
    _
  $region5: #{residual_forward.1} parent=0 // pred_fallthru
    _
  // Predicated region
  $region6: #{residual_forward.1} parent=0 // pred_check
    _
  $region7: #{residual_forward.1} parent=0 // pred_check_branch
    %15 = sbr.rel (0) target = $region9
  $region8: #{residual_forward.1} parent=0 // pred_region
    _
  $region9: #{residual_forward.1} parent=0 // pred_fallthru
    _
  // Predicated region
  $region10: #{residual_forward.1} parent=0 // pred_check
    _
  $region11: #{residual_forward.1} parent=0 // pred_check_branch
    %17 = sbr.rel (0) target = $region13
  $region12: #{residual_forward.1} parent=0 // pred_region
    _
  $region13: #{residual_forward.1} parent=0 // pred_fallthru
    _
  // Predicated region
  $region14: #{residual_forward.1} parent=0 // pred_check
    _
  $region15: #{residual_forward.1} parent=0 // pred_check_branch
    %19 = sbr.rel (0) target = $region17
  $region16: #{residual_forward.1} parent=0 // pred_region
    _
  $region17: #{residual_forward.1} parent=0 // pred_fallthru
    _
  // Predicated region
  $region18: #{residual_forward.1} parent=0 // pred_check
    _
  $region19: #{residual_forward.1} parent=0 // pred_check_branch
    %21 = sbr.rel (0) target = $region21
  $region20: #{residual_forward.1} parent=0 // pred_region
    _
  $region21: #{residual_forward.1} parent=0 // pred_fallthru
    _
  // Predicated region
  $region22: #{residual_forward.1} parent=0 // pred_check
    _
  $region23: #{residual_forward.1} parent=0 // pred_check_branch
    %23 = sbr.rel (0) target = $region25
  $region24: #{residual_forward.1} parent=0 // pred_region
    _
  $region25: #{residual_forward.1} parent=0 // pred_fallthru
    _
  // Predicated region
  $region26: #{residual_forward.1} parent=0 // pred_check
    _
  $region27: #{residual_forward.1} parent=0 // pred_check_branch
    %25 = sbr.rel (0) target = $region29
  $region28: #{residual_forward.1} parent=0 // pred_region
    _
  $region29: #{residual_forward.1} parent=0 // pred_fallthru
    _
  %v27 = vlaneseq
  %v28 = vshrl.u32 %v27, 7
  %v29 = vadd.s32 %v28, 8
  %v30 = vadd.s32 %v28, 16
  %v31 = vadd.s32 %v28, 24
  %vm32 = vcmp.lt.s32.totalorder %v28, 0
  %v33 = vsub.s32 0, %v28
  %v34 = vsel %vm32, %v33, %v28
  %v35 = vshrl.u32 %v34, 4
  %v36 = vand.u32 %v34, 15
  %v37 = vsub.s32 0, %v36
  %v38 = vsel %vm32, %v37, %v36
  %vm39 = vcmp.lt.s32.totalorder %v29, 0
  %v40 = vsub.s32 0, %v29
  %v41 = vsel %vm39, %v40, %v29
  %v42 = vshrl.u32 %v41, 4
  %v43 = vand.u32 %v41, 15
  %v44 = vsub.s32 0, %v43
  %v45 = vsel %vm39, %v44, %v43
  %vm46 = vcmp.lt.s32.totalorder %v30, 0
  %v47 = vsub.s32 0, %v30
  %v48 = vsel %vm46, %v47, %v30
  %v49 = vshrl.u32 %v48, 4
  %v50 = vand.u32 %v48, 15
  %v51 = vsub.s32 0, %v50
  %v52 = vsel %vm46, %v51, %v50
  %vm53 = vcmp.lt.s32.totalorder %v31, 0
  %v54 = vsub.s32 0, %v31
  %v55 = vsel %vm53, %v54, %v31
  %v56 = vshrl.u32 %v55, 4
  %v57 = vand.u32 %v55, 15
  %v58 = vsub.s32 0, %v57
  %v59 = vsel %vm53, %v58, %v57
  %vm60 = vcmp.ne.s32.totalorder %v38, 0
  %vm61 = vcmp.ne.s32.totalorder %v45, 0
  %vm62 = vcmp.ne.s32.totalorder %v52, 0
  %vm63 = vcmp.ne.s32.totalorder %v59, 0
  %vm64 = vcmp.lt.s32.totalorder %v38, 0
  %vm65 = vcmp.lt.s32.totalorder %v45, 0
  %vm66 = vcmp.lt.s32.totalorder %v52, 0
  %vm67 = vcmp.lt.s32.totalorder %v59, 0
  %vm68 = vmand %vm64, %vm60
  %vm69 = vmand %vm65, %vm61
  %vm70 = vmand %vm66, %vm62
  %vm71 = vmand %vm67, %vm63
  %v72 = vadd.s32 %v38, 16
  %v73 = vadd.s32 %v45, 16
  %v74 = vadd.s32 %v52, 16
  %v75 = vadd.s32 %v59, 16
  %v76 = vsel %vm68, %v72, %v38
  %v77 = vsel %vm69, %v73, %v45
  %v78 = vsel %vm70, %v74, %v52
  %v79 = vsel %vm71, %v75, %v59
  %vm80 = vcmp.ne.s32.totalorder %v76, 0
  %vm81 = vcmp.ne.s32.totalorder %v77, 0
  %vm82 = vcmp.ne.s32.totalorder %v78, 0
  %vm83 = vcmp.ne.s32.totalorder %v79, 0
  %v84 = vsel %vm80, 1, 0
  %v85 = vsel %vm81, 1, 0
  %v86 = vsel %vm82, 1, 0
  %v87 = vsel %vm83, 1, 0
  %v88 = vcvt.s32.f32 %v84
  %v89 = vcvt.s32.f32 %v85
  %v90 = vcvt.s32.f32 %v86
  %v91 = vcvt.s32.f32 %v87
  %vm92 = vcmp.ne.s32.totalorder %v76, 15
  %vm93 = vcmp.ne.s32.totalorder %v77, 15
  %vm94 = vcmp.ne.s32.totalorder %v78, 15
  %vm95 = vcmp.ne.s32.totalorder %v79, 15
  %v96 = vsel %vm92, 1, 0
  %v97 = vsel %vm93, 1, 0
  %v98 = vsel %vm94, 1, 0
  %v99 = vsel %vm95, 1, 0
  %v100 = vcvt.s32.f32 %v96
  %v101 = vcvt.s32.f32 %v97
  %v102 = vcvt.s32.f32 %v98
  %v103 = vcvt.s32.f32 %v99
  %v104 = vld [vmem:[%s0] sm:$0xff]
  %v105 = vld [vmem:[%s0 + $0x8] sm:$0xff]
  %v106 = vld [vmem:[%s0 + $0x10] sm:$0xff]
  %v107 = vld [vmem:[%s0 + $0x18] sm:$0xff]
  %v108 = vpack.c.bf16 %v105, %v104
  %v109 = vpack.c.bf16 %v107, %v106
  %v110 = vld [vmem:[%s1] sm:$0xf]
  %v111 = vld [vmem:[%s1 + $0x4] sm:$0xf]
  %v112 = vld [vmem:[%s1 + $0x8] sm:$0xf]
  %v113 = vld [vmem:[%s1 + $0xc] sm:$0xf]
  %v114 = vld [vmem:[%s1 + $0x10] sm:$0xf]
  %v115 = vld [vmem:[%s1 + $0x14] sm:$0xf]
  %v116 = vld [vmem:[%s1 + $0x18] sm:$0xf]
  %v117 = vld [vmem:[%s1 + $0x1c] sm:$0xf]
  %v126 = vunpack.c.l.b16 %v110
  %v127 = vunpack.c.l.b16 %v111
  %v128 = vunpack.c.l.b16 %v112
  %v129 = vunpack.c.l.b16 %v113
  %v130 = vunpack.c.l.b16 %v114
  %v131 = vunpack.c.l.b16 %v115
  %v132 = vunpack.c.l.b16 %v116
  %v133 = vunpack.c.l.b16 %v117
  %v134 = vpack.c.b16 %v127, %v126
  %v135 = vpack.c.b16 %v129, %v128
  %v136 = vpack.c.b16 %v131, %v130
  %v137 = vpack.c.b16 %v133, %v132
  %vm142 = vcmask 523264
  %v144 = vsel %vm142, %v108, 0
  %v147 = vsel %vm142, %v109, 0
  %149 = vmatpush.bf16.msra.mxu0 0
  %150 = vmatpush.bf16.msra.mxu0 0
  %151 = vmatpush.bf16.msra.mxu0 0
  %152 = vmatpush.bf16.msra.mxu0 0
  %153 = vmatpush.bf16.msra.mxu0 %v137
  %154 = vmatpush.bf16.msra.mxu0 %v136
  %155 = vmatpush.bf16.msra.mxu0 %v135
  %156 = vmatpush.bf16.msra.mxu0 %v134
  %157 = vmatmul.bf16.gmra.mxu0 %v144
  %v158 = vpop.f32.mrf.mxu0
  %v159 = vadd.f32 0.0, %v158
  %v160 = vpop.f32.mrf.mxu0
  %v161 = vadd.f32 0.0, %v160
  %162 = vmatmul.bf16.gmra.mxu0 %v147
  %v163 = vpop.f32.mrf.mxu0
  %v164 = vadd.f32 0.0, %v163
  %v165 = vpop.f32.mrf.mxu0
  %v166 = vadd.f32 0.0, %v165
  %167 = vdwg.mxu0
  %s168 = scalar_lea.vmem %s1, 32
  %v169 = vld [vmem:[%s168] sm:$0xf]
  %v170 = vld [vmem:[%s168 + $0x4] sm:$0xf]
  %v171 = vld [vmem:[%s168 + $0x8] sm:$0xf]
  %v172 = vld [vmem:[%s168 + $0xc] sm:$0xf]
  %v173 = vld [vmem:[%s168 + $0x10] sm:$0xf]
  %v174 = vld [vmem:[%s168 + $0x14] sm:$0xf]
  %v175 = vld [vmem:[%s168 + $0x18] sm:$0xf]
  %v176 = vld [vmem:[%s168 + $0x1c] sm:$0xf]
  %s177 = scalar_lea.vmem %s1, 64
  %v178 = vld [vmem:[%s177] sm:$0xf]
  %v179 = vld [vmem:[%s177 + $0x4] sm:$0xf]
  %v180 = vld [vmem:[%s177 + $0x8] sm:$0xf]
  %v181 = vld [vmem:[%s177 + $0xc] sm:$0xf]
  %v182 = vld [vmem:[%s177 + $0x10] sm:$0xf]
  %v183 = vld [vmem:[%s177 + $0x14] sm:$0xf]
  %v184 = vld [vmem:[%s177 + $0x18] sm:$0xf]
  %v185 = vld [vmem:[%s177 + $0x1c] sm:$0xf]
  %v194 = vunpack.c.l.b16 %v178
  %v195 = vunpack.c.l.b16 %v179
  %v196 = vunpack.c.l.b16 %v180
  %v197 = vunpack.c.l.b16 %v181
  %v198 = vunpack.c.l.b16 %v182
  %v199 = vunpack.c.l.b16 %v183
  %v200 = vunpack.c.l.b16 %v184
  %v201 = vunpack.c.l.b16 %v185
  %v202 = vpack.c.b16 %v195, %v194
  %v203 = vpack.c.b16 %v197, %v196
  %v204 = vpack.c.b16 %v199, %v198
  %v205 = vpack.c.b16 %v201, %v200
  %210 = vmatpush.bf16.msra.mxu0 0
  %211 = vmatpush.bf16.msra.mxu0 0
  %212 = vmatpush.bf16.msra.mxu0 0
  %213 = vmatpush.bf16.msra.mxu0 0
  %214 = vmatpush.bf16.msra.mxu0 %v205
  %215 = vmatpush.bf16.msra.mxu0 %v204
  %216 = vmatpush.bf16.msra.mxu0 %v203
  %217 = vmatpush.bf16.msra.mxu0 %v202
  %218 = vmatmul.bf16.gmra.mxu0 %v144
  %v219 = vpop.f32.mrf.mxu0
  %v220 = vadd.f32 0.0, %v219
  %v221 = vpop.f32.mrf.mxu0
  %v222 = vadd.f32 0.0, %v221
  %223 = vmatmul.bf16.gmra.mxu0 %v147
  %v224 = vpop.f32.mrf.mxu0
  %v225 = vadd.f32 0.0, %v224
  %v226 = vpop.f32.mrf.mxu0
  %v227 = vadd.f32 0.0, %v226
  %228 = vdwg.mxu0
  %v229 = vrot.slane %v159, 7
  %v230 = vrot.slane %v161, 7
  %v231 = vrot.slane %v164, 7
  %v232 = vrot.slane %v166, 7
  %vm233 = vcmp.lt.s32.totalorder %v28, 1
  %v234 = vsel %vm233, %v231, %v232
  %v235 = vsel %vm233, %v230, %v231
  %v236 = vsel %vm233, %v229, %v230
  %v237 = vsel %vm233, %v232, %v229
  %v238 = vmul.f32 %v88, %v237
  %v239 = vmul.f32 %v89, %v236
  %v240 = vmul.f32 %v90, %v235
  %v241 = vmul.f32 %v91, %v234
  %v250 = vunpack.c.l.b16 %v169
  %v251 = vunpack.c.l.b16 %v170
  %v252 = vunpack.c.l.b16 %v171
  %v253 = vunpack.c.l.b16 %v172
  %v254 = vunpack.c.l.b16 %v173
  %v255 = vunpack.c.l.b16 %v174
  %v256 = vunpack.c.l.b16 %v175
  %v257 = vunpack.c.l.b16 %v176
  %v258 = vpack.c.b16 %v251, %v250
  %v259 = vpack.c.b16 %v253, %v252
  %v260 = vpack.c.b16 %v255, %v254
  %v261 = vpack.c.b16 %v257, %v256
  %266 = vmatpush.bf16.msra.mxu0 0
  %267 = vmatpush.bf16.msra.mxu0 0
  %268 = vmatpush.bf16.msra.mxu0 0
  %269 = vmatpush.bf16.msra.mxu0 0
  %270 = vmatpush.bf16.msra.mxu0 %v261
  %271 = vmatpush.bf16.msra.mxu0 %v260
  %272 = vmatpush.bf16.msra.mxu0 %v259
  %273 = vmatpush.bf16.msra.mxu0 %v258
  %274 = vmatmul.bf16.gmra.mxu0 %v144
  %v275 = vpop.f32.mrf.mxu0
  %v276 = vadd.f32 %v238, %v275
  %v277 = vpop.f32.mrf.mxu0
  %v278 = vadd.f32 %v239, %v277
  %279 = vmatmul.bf16.gmra.mxu0 %v147
  %v280 = vpop.f32.mrf.mxu0
  %v281 = vadd.f32 %v240, %v280
  %v282 = vpop.f32.mrf.mxu0
  %v283 = vadd.f32 %v241, %v282
  %284 = vdwg.mxu0
  %v285 = vrot.slane %v220, 1
  %v286 = vrot.slane %v222, 1
  %v287 = vrot.slane %v225, 1
  %v288 = vrot.slane %v227, 1
  %vm289 = vcmp.lt.s32.totalorder %v28, 7
  %v290 = vsel %vm289, %v287, %v288
  %v291 = vsel %vm289, %v286, %v287
  %v292 = vsel %vm289, %v285, %v286
  %v293 = vsel %vm289, %v288, %v285
  %v294 = vmul.f32 %v100, %v292
  %v295 = vmul.f32 %v101, %v291
  %v296 = vmul.f32 %v102, %v290
  %v297 = vmul.f32 %v103, %v293
  %v298 = vadd.f32 %v276, %v294
  %v299 = vadd.f32 %v278, %v295
  %v300 = vadd.f32 %v281, %v296
  %v301 = vadd.f32 %v283, %v297
  %v302 = vld [vmem:[%s2] sm:$0x1]
  %v303 = vld [vmem:[%s3] sm:$0x1]
  %v304 = vsel %vm142, %v298, 0.0
  %v305 = vsel %vm142, %v299, 0.0
  %v306 = vadd.f32 %v304, %v305
  %v307 = vsel %vm142, %v300, 0.0
  %v308 = vadd.f32 %v306, %v307
  %v309 = vsel %vm142, %v301, 0.0
  %v310 = vadd.f32 %v308, %v309
  %v311 = vrot.slane %v310, 4
  %v312 = vadd.f32 %v310, %v311
  %v313 = vrot.slane %v312, 2
  %v314 = vadd.f32 %v312, %v313
  %v315 = vrot.slane %v314, 1
  %v316 = vadd.f32 %v314, %v315
  %v317 = vmul.f32 %v298, %v298
  %v318 = vmul.f32 %v299, %v299
  %v319 = vmul.f32 %v300, %v300
  %v320 = vmul.f32 %v301, %v301
  %v321 = vsel %vm142, %v317, 0.0
  %v322 = vsel %vm142, %v318, 0.0
  %v323 = vadd.f32 %v321, %v322
  %v324 = vsel %vm142, %v319, 0.0
  %v325 = vadd.f32 %v323, %v324
  %v326 = vsel %vm142, %v320, 0.0
  %v327 = vadd.f32 %v325, %v326
  %v328 = vrot.slane %v327, 4
  %v329 = vadd.f32 %v327, %v328
  %v330 = vrot.slane %v329, 2
  %v331 = vadd.f32 %v329, %v330
  %v332 = vrot.slane %v331, 1
  %v333 = vadd.f32 %v331, %v332
  %vm334 = vcmask 1040384
  %v335 = vsel %vm334, %v316, %v333
  %vm336 = vcmask 1048064
  %337 = vrot.lane.b32.xlu0 %v335, 64
  %v338 = vpop.permute.xlu0 %337
  %v339 = vsel %vm336, %v338, %v335
  %340 = vrot.lane.b32.xlu0 %v339, 64
  %v341 = vpop.permute.xlu0 %340
  %v342 = vsel %vm336, %v341, %v335
  %344 = vrot.lane.b32.xlu0 %v342, 68
  %v345 = vpop.permute.xlu0 %344
  %v347 = vadd.f32 %v335, %v345
  %348 = vrot.lane.b32.xlu0 %v347, 64
  %v349 = vpop.permute.xlu0 %348
  %v350 = vsel %vm336, %v349, %v347
  %351 = vrot.lane.b32.xlu0 %v350, 64
  %v352 = vpop.permute.xlu0 %351
  %v353 = vsel %vm336, %v352, %v347
  %355 = vrot.lane.b32.xlu0 %v353, 72
  %v356 = vpop.permute.xlu0 %355
  %v358 = vadd.f32 %v347, %v356
  %359 = vrot.lane.b32.xlu0 %v358, 64
  %v360 = vpop.permute.xlu0 %359
  %v361 = vsel %vm336, %v360, %v358
  %362 = vrot.lane.b32.xlu0 %v361, 64
  %v363 = vpop.permute.xlu0 %362
  %v364 = vsel %vm336, %v363, %v358
  %366 = vrot.lane.b32.xlu0 %v364, 80
  %v367 = vpop.permute.xlu0 %366
  %v369 = vadd.f32 %v358, %v367
  %370 = vrot.lane.b32.xlu0 %v369, 64
  %v371 = vpop.permute.xlu0 %370
  %v372 = vsel %vm336, %v371, %v369
  %373 = vrot.lane.b32.xlu0 %v372, 64
  %v374 = vpop.permute.xlu0 %373
  %v375 = vsel %vm336, %v374, %v369
  %377 = vrot.lane.b32.xlu0 %v375, 96
  %v378 = vpop.permute.xlu0 %377
  %v380 = vadd.f32 %v369, %v378
  %v381 = vmul.f32 %v380, 0.001953125
  %v382 = vmul.f32 %v381, %v381
  %v384 = vrot.slane %v382, 7
  %v386 = vsub.f32 %v381, %v384
  %v387 = vadd.f32 %v386, 1e-05
  %v388 = vrsqrt.pop %v387
  %v389 = vmul.f32 %v388, %v387
  %v390 = vmul.f32 %v389, %v388
  %v391 = vmul.f32 0.5, %v390
  %v392 = vsub.f32 1.5, %v391
  %v393 = vmul.f32 %v388, %v392
  %vm394 = vweird.f32 %v387
  %vm395 = vweird.f32 %v388
  %vm396 = vmor %vm394, %vm395
  %v397 = vsel %vm396, %v388, %v393
  %399 = vst [vmem:[#allocation1] sm:$0xff] %v397
  %s400 = scalar_lea.vmem [#allocation1], 1
  %v401 = vld [vmem:[%s400] ss:$9 sm:$0xff]
  %v403 = vmul.f32 %v302, %v401
  %v404 = vmul.f32 %v381, %v403
  %v405 = vsub.f32 %v303, %v404
  %v407 = vperm.slane %v403, 0
  %v409 = vmul.f32 %v298, %v407
  %v410 = vmul.f32 %v299, %v407
  %v411 = vmul.f32 %v300, %v407
  %v412 = vmul.f32 %v301, %v407
  %v414 = vperm.slane %v405, 0
  %v416 = vadd.f32 %v409, %v414
  %v417 = vadd.f32 %v410, %v414
  %v418 = vadd.f32 %v411, %v414
  %v419 = vadd.f32 %v412, %v414
  %v420 = vmax.f32 %v416, 0.0
  %v421 = vmax.f32 %v417, 0.0
  %v422 = vmax.f32 %v418, 0.0
  %v423 = vmax.f32 %v419, 0.0
  %v424 = vpack.c.bf16 %v421, %v420
  %v425 = vpack.c.bf16 %v423, %v422
  %v426 = vld [vmem:[%s4] sm:$0xf]
  %v427 = vld [vmem:[%s4 + $0x4] sm:$0xf]
  %v428 = vld [vmem:[%s4 + $0x8] sm:$0xf]
  %v429 = vld [vmem:[%s4 + $0xc] sm:$0xf]
  %v430 = vld [vmem:[%s4 + $0x10] sm:$0xf]
  %v431 = vld [vmem:[%s4 + $0x14] sm:$0xf]
  %v432 = vld [vmem:[%s4 + $0x18] sm:$0xf]
  %v433 = vld [vmem:[%s4 + $0x1c] sm:$0xf]
  %v442 = vunpack.c.l.b16 %v426
  %v443 = vunpack.c.l.b16 %v427
  %v444 = vunpack.c.l.b16 %v428
  %v445 = vunpack.c.l.b16 %v429
  %v446 = vunpack.c.l.b16 %v430
  %v447 = vunpack.c.l.b16 %v431
  %v448 = vunpack.c.l.b16 %v432
  %v449 = vunpack.c.l.b16 %v433
  %v450 = vpack.c.b16 %v443, %v442
  %v451 = vpack.c.b16 %v445, %v444
  %v452 = vpack.c.b16 %v447, %v446
  %v453 = vpack.c.b16 %v449, %v448
  %v459 = vsel %vm142, %v424, 0
  %v462 = vsel %vm142, %v425, 0
  %464 = vmatpush.bf16.msra.mxu0 0
  %465 = vmatpush.bf16.msra.mxu0 0
  %466 = vmatpush.bf16.msra.mxu0 0
  %467 = vmatpush.bf16.msra.mxu0 0
  %468 = vmatpush.bf16.msra.mxu0 %v453
  %469 = vmatpush.bf16.msra.mxu0 %v452
  %470 = vmatpush.bf16.msra.mxu0 %v451
  %471 = vmatpush.bf16.msra.mxu0 %v450
  %472 = vmatmul.bf16.gmra.mxu0 %v459
  %v473 = vpop.f32.mrf.mxu0
  %v474 = vadd.f32 0.0, %v473
  %v475 = vpop.f32.mrf.mxu0
  %v476 = vadd.f32 0.0, %v475
  %477 = vmatmul.bf16.gmra.mxu0 %v462
  %v478 = vpop.f32.mrf.mxu0
  %v479 = vadd.f32 0.0, %v478
  %v480 = vpop.f32.mrf.mxu0
  %v481 = vadd.f32 0.0, %v480
  %482 = vdwg.mxu0
  %s483 = scalar_lea.vmem %s4, 32
  %v484 = vld [vmem:[%s483] sm:$0xf]
  %v485 = vld [vmem:[%s483 + $0x4] sm:$0xf]
  %v486 = vld [vmem:[%s483 + $0x8] sm:$0xf]
  %v487 = vld [vmem:[%s483 + $0xc] sm:$0xf]
  %v488 = vld [vmem:[%s483 + $0x10] sm:$0xf]
  %v489 = vld [vmem:[%s483 + $0x14] sm:$0xf]
  %v490 = vld [vmem:[%s483 + $0x18] sm:$0xf]
  %v491 = vld [vmem:[%s483 + $0x1c] sm:$0xf]
  %s492 = scalar_lea.vmem %s4, 64
  %v493 = vld [vmem:[%s492] sm:$0xf]
  %v494 = vld [vmem:[%s492 + $0x4] sm:$0xf]
  %v495 = vld [vmem:[%s492 + $0x8] sm:$0xf]
  %v496 = vld [vmem:[%s492 + $0xc] sm:$0xf]
  %v497 = vld [vmem:[%s492 + $0x10] sm:$0xf]
  %v498 = vld [vmem:[%s492 + $0x14] sm:$0xf]
  %v499 = vld [vmem:[%s492 + $0x18] sm:$0xf]
  %v500 = vld [vmem:[%s492 + $0x1c] sm:$0xf]
  %v509 = vunpack.c.l.b16 %v493
  %v510 = vunpack.c.l.b16 %v494
  %v511 = vunpack.c.l.b16 %v495
  %v512 = vunpack.c.l.b16 %v496
  %v513 = vunpack.c.l.b16 %v497
  %v514 = vunpack.c.l.b16 %v498
  %v515 = vunpack.c.l.b16 %v499
  %v516 = vunpack.c.l.b16 %v500
  %v517 = vpack.c.b16 %v510, %v509
  %v518 = vpack.c.b16 %v512, %v511
  %v519 = vpack.c.b16 %v514, %v513
  %v520 = vpack.c.b16 %v516, %v515
  %525 = vmatpush.bf16.msra.mxu0 0
  %526 = vmatpush.bf16.msra.mxu0 0
  %527 = vmatpush.bf16.msra.mxu0 0
  %528 = vmatpush.bf16.msra.mxu0 0
  %529 = vmatpush.bf16.msra.mxu0 %v520
  %530 = vmatpush.bf16.msra.mxu0 %v519
  %531 = vmatpush.bf16.msra.mxu0 %v518
  %532 = vmatpush.bf16.msra.mxu0 %v517
  %533 = vmatmul.bf16.gmra.mxu0 %v459
  %v534 = vpop.f32.mrf.mxu0
  %v535 = vadd.f32 0.0, %v534
  %v536 = vpop.f32.mrf.mxu0
  %v537 = vadd.f32 0.0, %v536
  %538 = vmatmul.bf16.gmra.mxu0 %v462
  %v539 = vpop.f32.mrf.mxu0
  %v540 = vadd.f32 0.0, %v539
  %v541 = vpop.f32.mrf.mxu0
  %v542 = vadd.f32 0.0, %v541
  %543 = vdwg.mxu0
  %v544 = vrot.slane %v474, 7
  %v545 = vrot.slane %v476, 7
  %v546 = vrot.slane %v479, 7
  %v547 = vrot.slane %v481, 7
  %v548 = vsel %vm233, %v546, %v547
  %v549 = vsel %vm233, %v545, %v546
  %v550 = vsel %vm233, %v544, %v545
  %v551 = vsel %vm233, %v547, %v544
  %v552 = vmul.f32 %v88, %v551
  %v553 = vmul.f32 %v89, %v550
  %v554 = vmul.f32 %v90, %v549
  %v555 = vmul.f32 %v91, %v548
  %v564 = vunpack.c.l.b16 %v484
  %v565 = vunpack.c.l.b16 %v485
  %v566 = vunpack.c.l.b16 %v486
  %v567 = vunpack.c.l.b16 %v487
  %v568 = vunpack.c.l.b16 %v488
  %v569 = vunpack.c.l.b16 %v489
  %v570 = vunpack.c.l.b16 %v490
  %v571 = vunpack.c.l.b16 %v491
  %v572 = vpack.c.b16 %v565, %v564
  %v573 = vpack.c.b16 %v567, %v566
  %v574 = vpack.c.b16 %v569, %v568
  %v575 = vpack.c.b16 %v571, %v570
  %580 = vmatpush.bf16.msra.mxu0 0
  %581 = vmatpush.bf16.msra.mxu0 0
  %582 = vmatpush.bf16.msra.mxu0 0
  %583 = vmatpush.bf16.msra.mxu0 0
  %584 = vmatpush.bf16.msra.mxu0 %v575
  %585 = vmatpush.bf16.msra.mxu0 %v574
  %586 = vmatpush.bf16.msra.mxu0 %v573
  %587 = vmatpush.bf16.msra.mxu0 %v572
  %588 = vmatmul.bf16.gmra.mxu0 %v459
  %v589 = vpop.f32.mrf.mxu0
  %v590 = vadd.f32 %v552, %v589
  %v591 = vpop.f32.mrf.mxu0
  %v592 = vadd.f32 %v553, %v591
  %593 = vmatmul.bf16.gmra.mxu0 %v462
  %v594 = vpop.f32.mrf.mxu0
  %v595 = vadd.f32 %v554, %v594
  %v596 = vpop.f32.mrf.mxu0
  %v597 = vadd.f32 %v555, %v596
  %598 = vdwg.mxu0
  %v599 = vrot.slane %v535, 1
  %v600 = vrot.slane %v537, 1
  %v601 = vrot.slane %v540, 1
  %v602 = vrot.slane %v542, 1
  %v603 = vsel %vm289, %v601, %v602
  %v604 = vsel %vm289, %v600, %v601
  %v605 = vsel %vm289, %v599, %v600
  %v606 = vsel %vm289, %v602, %v599
  %v607 = vmul.f32 %v100, %v605
  %v608 = vmul.f32 %v101, %v604
  %v609 = vmul.f32 %v102, %v603
  %v610 = vmul.f32 %v103, %v606
  %v611 = vadd.f32 %v590, %v607
  %v612 = vadd.f32 %v592, %v608
  %v613 = vadd.f32 %v595, %v609
  %v614 = vadd.f32 %v597, %v610
  %v615 = vld [vmem:[%s5] sm:$0x1]
  %v616 = vld [vmem:[%s6] sm:$0x1]
  %v617 = vsel %vm142, %v611, 0.0
  %v618 = vsel %vm142, %v612, 0.0
  %v619 = vadd.f32 %v617, %v618
  %v620 = vsel %vm142, %v613, 0.0
  %v621 = vadd.f32 %v619, %v620
  %v622 = vsel %vm142, %v614, 0.0
  %v623 = vadd.f32 %v621, %v622
  %v624 = vrot.slane %v623, 4
  %v625 = vadd.f32 %v623, %v624
  %v626 = vrot.slane %v625, 2
  %v627 = vadd.f32 %v625, %v626
  %v628 = vrot.slane %v627, 1
  %v629 = vadd.f32 %v627, %v628
  %v630 = vmul.f32 %v611, %v611
  %v631 = vmul.f32 %v612, %v612
  %v632 = vmul.f32 %v613, %v613
  %v633 = vmul.f32 %v614, %v614
  %v634 = vsel %vm142, %v630, 0.0
  %v635 = vsel %vm142, %v631, 0.0
  %v636 = vadd.f32 %v634, %v635
  %v637 = vsel %vm142, %v632, 0.0
  %v638 = vadd.f32 %v636, %v637
  %v639 = vsel %vm142, %v633, 0.0
  %v640 = vadd.f32 %v638, %v639
  %v641 = vrot.slane %v640, 4
  %v642 = vadd.f32 %v640, %v641
  %v643 = vrot.slane %v642, 2
  %v644 = vadd.f32 %v642, %v643
  %v645 = vrot.slane %v644, 1
  %v646 = vadd.f32 %v644, %v645
  %v647 = vsel %vm334, %v629, %v646
  %648 = vrot.lane.b32.xlu0 %v647, 64
  %v649 = vpop.permute.xlu0 %648
  %v650 = vsel %vm336, %v649, %v647
  %651 = vrot.lane.b32.xlu0 %v650, 64
  %v652 = vpop.permute.xlu0 %651
  %v653 = vsel %vm336, %v652, %v647
  %655 = vrot.lane.b32.xlu0 %v653, 68
  %v656 = vpop.permute.xlu0 %655
  %v658 = vadd.f32 %v647, %v656
  %659 = vrot.lane.b32.xlu0 %v658, 64
  %v660 = vpop.permute.xlu0 %659
  %v661 = vsel %vm336, %v660, %v658
  %662 = vrot.lane.b32.xlu0 %v661, 64
  %v663 = vpop.permute.xlu0 %662
  %v664 = vsel %vm336, %v663, %v658
  %666 = vrot.lane.b32.xlu0 %v664, 72
  %v667 = vpop.permute.xlu0 %666
  %v669 = vadd.f32 %v658, %v667
  %670 = vrot.lane.b32.xlu0 %v669, 64
  %v671 = vpop.permute.xlu0 %670
  %v672 = vsel %vm336, %v671, %v669
  %673 = vrot.lane.b32.xlu0 %v672, 64
  %v674 = vpop.permute.xlu0 %673
  %v675 = vsel %vm336, %v674, %v669
  %677 = vrot.lane.b32.xlu0 %v675, 80
  %v678 = vpop.permute.xlu0 %677
  %v680 = vadd.f32 %v669, %v678
  %681 = vrot.lane.b32.xlu0 %v680, 64
  %v682 = vpop.permute.xlu0 %681
  %v683 = vsel %vm336, %v682, %v680
  %684 = vrot.lane.b32.xlu0 %v683, 64
  %v685 = vpop.permute.xlu0 %684
  %v686 = vsel %vm336, %v685, %v680
  %688 = vrot.lane.b32.xlu0 %v686, 96
  %v689 = vpop.permute.xlu0 %688
  %v691 = vadd.f32 %v680, %v689
  %v692 = vmul.f32 %v691, 0.001953125
  %v693 = vmul.f32 %v692, %v692
  %v695 = vrot.slane %v693, 7
  %v697 = vsub.f32 %v692, %v695
  %v698 = vadd.f32 %v697, 1e-05
  %v699 = vrsqrt.pop %v698
  %v700 = vmul.f32 %v699, %v698
  %v701 = vmul.f32 %v700, %v699
  %v702 = vmul.f32 0.5, %v701
  %v703 = vsub.f32 1.5, %v702
  %v704 = vmul.f32 %v699, %v703
  %vm705 = vweird.f32 %v698
  %vm706 = vweird.f32 %v699
  %vm707 = vmor %vm705, %vm706
  %v708 = vsel %vm707, %v699, %v704
  %710 = vst [vmem:[#allocation1] sm:$0xff] %v708
  %s711 = scalar_lea.vmem [#allocation1], 1
  %v712 = vld [vmem:[%s711] ss:$9 sm:$0xff]
  %v714 = vmul.f32 %v615, %v712
  %v715 = vmul.f32 %v692, %v714
  %v716 = vsub.f32 %v616, %v715
  %v718 = vperm.slane %v714, 0
  %v720 = vmul.f32 %v611, %v718
  %v721 = vmul.f32 %v612, %v718
  %v722 = vmul.f32 %v613, %v718
  %v723 = vmul.f32 %v614, %v718
  %v725 = vperm.slane %v716, 0
  %v727 = vadd.f32 %v720, %v725
  %v728 = vadd.f32 %v721, %v725
  %v729 = vadd.f32 %v722, %v725
  %v730 = vadd.f32 %v723, %v725
  %v731 = vadd.f32 %v727, %v104
  %v732 = vadd.f32 %v728, %v105
  %v733 = vadd.f32 %v729, %v106
  %v734 = vadd.f32 %v730, %v107
  %v735 = vmax.f32 %v731, 0.0
  %v736 = vmax.f32 %v732, 0.0
  %v737 = vmax.f32 %v733, 0.0
  %v738 = vmax.f32 %v734, 0.0
  %739 = vst.msk [vmem:[%s7] sm:$0xff] %vm142, %v735
  %740 = vst.msk [vmem:[%s7 + $0x8] sm:$0xff] %vm142, %v736
  %741 = vst.msk [vmem:[%s7 + $0x10] sm:$0xff] %vm142, %v737
  %742 = vst.msk [vmem:[%s7 + $0x18] sm:$0xff] %vm142, %v738
  // Predicated region
  $region30: #{residual_forward.1} parent=0 // pred_check
    _
  $region31: #{residual_forward.1} parent=0 // pred_check_branch
    %744 = sbr.rel (0) target = $region33
  $region32: #{residual_forward.1} parent=0 // pred_region
    _
  $region33: #{residual_forward.1} parent=0 // pred_fallthru
    _
  // Predicated region
  $region34: #{residual_forward.1} parent=0 // pred_check
    _
  $region35: #{residual_forward.1} parent=0 // pred_check_branch
    %746 = sbr.rel (0) target = $region37
  $region36: #{residual_forward.1} parent=0 // pred_region
    _
  $region37: #{residual_forward.1} parent=0 // pred_fallthru
    _

</llo_original>
